<compile_context>
chip_gen: v7x
topology: tpu7x:2x2x1
jax: 0.10.0
libtpu: 0.0.40
codegen_flags: <defaults>
</compile_context>

<pallas_src>
import functools

import jax
import jax.numpy as jnp
from jax.experimental import pallas as pl
from jax.experimental.pallas import tpu as pltpu

EPS = 1e-8
_VMEM_LIMIT_BYTES = 48 * 1024 * 1024       # safe on v7x (64 MiB phys), v5e/v6e (128 MiB)
_FAST_PATH_MAX_BYTES = 8 * 1024 * 1024     # obs-as-f32 bytes for the single-visit path
_TARGET_BLOCK_BYTES = 8 * 1024 * 1024      # streaming tile target (f32 block)


def _round_up(x, m):
    return ((x + m - 1) // m) * m


# --------------------------------------------------------------------------- #
# Fast path: whole obs resident in VMEM, stats + normalize in one invocation. #
# --------------------------------------------------------------------------- #
def _fused_kernel(count_ref, x_ref, mean_ref, var_ref,
                  out_ref, new_mean_ref, new_var_ref, *, batch):
    x = x_ref[...].astype(jnp.float32)
    nb = float(batch)
    count0 = count_ref[0]

    # Single pass: column sum and sum of squares.
    bsum = jnp.sum(x, axis=0, keepdims=True)
    bsq = jnp.sum(x * x, axis=0, keepdims=True)
    batch_mean = bsum * (1.0 / nb)
    batch_var = bsq * (1.0 / nb) - batch_mean * batch_mean

    # update_mean_var_count_from_moments
    tot = count0 + nb
    w = nb / tot                                    # one scalar divide
    delta = batch_mean - mean_ref[...]
    new_mean = mean_ref[...] + delta * w
    m2 = var_ref[...] * count0 + batch_var * nb + (delta * delta) * (count0 * w)
    new_var = m2 / tot
    inv_std = jax.lax.rsqrt(new_var + EPS)          # hoisted: one (1, D) rsqrt

    new_mean_ref[...] = new_mean
    new_var_ref[...] = new_var
    out_ref[...] = ((x - new_mean) * inv_std).astype(out_ref.dtype)


# --------------------------------------------------------------------------- #
# Tiled path, pass 1: streaming stats reduction (sequential / "arbitrary").   #
# --------------------------------------------------------------------------- #
def _stats_kernel(count_ref, x_ref, mean_ref, var_ref,
                  new_mean_ref, new_var_ref, inv_std_ref,
                  acc_mean, acc_m2, *, batch, tile_rows, ragged):
    t = pl.program_id(0)
    nt = pl.num_programs(0)
    count0 = count_ref[0]

    @pl.when(t == 0)
    def _init():
        # Seed the accumulator with the running stats: (mean, M2 = var * count).
        acc_mean[...] = mean_ref[...]
        acc_m2[...] = var_ref[...] * count0

    x = x_ref[...].astype(jnp.float32)
    tf = t.astype(jnp.float32)
    if ragged:
        # Last tile overhangs the array: padded rows hold garbage -> mask them.
        row = jax.lax.broadcasted_iota(jnp.int32, x.shape, 0) + t * tile_rows
        x = jnp.where(row < batch, x, 0.0)
        nb = jnp.minimum(jnp.float32(batch) - jnp.float32(tile_rows) * tf,
                         jnp.float32(tile_rows))
        inv_nb = 1.0 / nb                            # one scalar divide per tile
    else:
        nb = float(tile_rows)
        inv_nb = 1.0 / nb

    # Single pass over the tile (~2 VALU ops/element): sum and sum of squares.
    tile_sum = jnp.sum(x, axis=0, keepdims=True)
    tile_sq = jnp.sum(x * x, axis=0, keepdims=True)
    tile_mean = tile_sum * inv_nb
    tile_m2 = tile_sq - nb * tile_mean * tile_mean

    # Chan / Welford merge of this tile into the accumulator.
    acc_count = count0 + jnp.float32(tile_rows) * tf   # samples merged so far
    tot = acc_count + nb
    w = nb / tot                                       # one scalar divide per tile
    delta = tile_mean - acc_mean[...]
    acc_mean[...] = acc_mean[...] + delta * w
    acc_m2[...] = acc_m2[...] + tile_m2 + (delta * delta) * (acc_count * w)

    @pl.when(t == nt - 1)
    def _finalize():
        new_var = acc_m2[...] / tot
        new_mean_ref[...] = acc_mean[...]
        new_var_ref[...] = new_var
        inv_std_ref[...] = jax.lax.rsqrt(new_var + EPS)   # hoisted rsqrt


# --------------------------------------------------------------------------- #
# Tiled path, pass 2: normalization ("parallel" -> megacore-shardable on v7x) #
# --------------------------------------------------------------------------- #
def _normalize_kernel(x_ref, mean_ref, inv_std_ref, out_ref):
    x = x_ref[...].astype(jnp.float32)
    out_ref[...] = ((x - mean_ref[...]) * inv_std_ref[...]).astype(out_ref.dtype)


def _pick_tile_rows(batch, d):
    """Rows per streaming tile: multiple of 8, block ~= _TARGET_BLOCK_BYTES (f32)."""
    row_bytes = d * 4
    tb = max(8, (_TARGET_BLOCK_BYTES // max(row_bytes, 1)) // 8 * 8)
    tb = min(tb, _round_up(batch, 8))
    if tb >= batch:
        return batch
    # TODO(synk): feature-axis tiling for enormous D (single 8-row block > VMEM budget).
    return tb


def running_mean_std_forward(obs, running_mean, running_var, count, *,
                             out_dtype=jnp.float32, force_tiled=False, tile_rows=None):
    """obs: (B, D); running_mean/var: (D,) f32; count: scalar f32.

    Returns (normalized_obs, new_running_mean, new_running_var, new_count),
    matching RunningMeanStd.forward(obs, update=True) (buffers returned functionally).
    """
    B, D = obs.shape
    mean2d = running_mean.astype(jnp.float32).reshape(1, D)
    var2d = running_var.astype(jnp.float32).reshape(1, D)
    count1 = jnp.asarray(count, jnp.float32).reshape(1)
    new_count = jnp.asarray(count, jnp.float32) + jnp.float32(B)

    smem_spec = pl.BlockSpec(memory_space=pltpu.MemorySpace.SMEM)
    obs_f32_bytes = B * D * 4

    # ----- Fast path: obs resident in VMEM, single HBM read of obs. -----
    if (obs_f32_bytes <= _FAST_PATH_MAX_BYTES) and not force_tiled:
        out, new_mean2d, new_var2d = pl.pallas_call(
            functools.partial(_fused_kernel, batch=B),
            out_shape=(
                jax.ShapeDtypeStruct((B, D), out_dtype),
                jax.ShapeDtypeStruct((1, D), jnp.float32),
                jax.ShapeDtypeStruct((1, D), jnp.float32),
            ),
            grid_spec=pltpu.PrefetchScalarGridSpec(
                num_scalar_prefetch=0,
                grid=(1,),
                in_specs=[
                    smem_spec,                                    # count (1,) in SMEM
                    pl.BlockSpec((B, D), lambda i: (0, 0)),       # obs (resident)
                    pl.BlockSpec((1, D), lambda i: (0, 0)),       # running mean
                    pl.BlockSpec((1, D), lambda i: (0, 0)),       # running var
                ],
                out_specs=(
                    pl.BlockSpec((B, D), lambda i: (0, 0)),
                    pl.BlockSpec((1, D), lambda i: (0, 0)),
                    pl.BlockSpec((1, D), lambda i: (0, 0)),
                ),
            ),
            compiler_params=pltpu.CompilerParams(
                dimension_semantics=("arbitrary",),
                vmem_limit_bytes=_VMEM_LIMIT_BYTES,
            ),
        )(count1, obs, mean2d, var2d)
        return out, new_mean2d[0], new_var2d[0], new_count

    # ----- Tiled path: stats reduction pass + parallel normalize pass. -----
    tb = tile_rows if tile_rows is not None else _pick_tile_rows(B, D)
    if tb < B and tb % 8 != 0:
        tb = max(8, (tb // 8) * 8)
    nt = pl.cdiv(B, tb)
    ragged = (B % tb) != 0

    new_mean2d, new_var2d, inv_std2d = pl.pallas_call(
        functools.partial(_stats_kernel, batch=B, tile_rows=tb, ragged=ragged),
        out_shape=(
            jax.ShapeDtypeStruct((1, D), jnp.float32),
            jax.ShapeDtypeStruct((1, D), jnp.float32),
            jax.ShapeDtypeStruct((1, D), jnp.float32),
        ),
        grid_spec=pltpu.PrefetchScalarGridSpec(
            num_scalar_prefetch=0,
            grid=(nt,),
            in_specs=[
                smem_spec,                                        # count (1,) in SMEM
                pl.BlockSpec((tb, D), lambda t: (t, 0)),          # obs tiles
                pl.BlockSpec((1, D), lambda t: (0, 0)),           # running mean (resident)
                pl.BlockSpec((1, D), lambda t: (0, 0)),           # running var  (resident)
            ],
            out_specs=(
                pl.BlockSpec((1, D), lambda t: (0, 0)),           # new_mean
                pl.BlockSpec((1, D), lambda t: (0, 0)),           # new_var
                pl.BlockSpec((1, D), lambda t: (0, 0)),           # inv_std
            ),
            scratch_shapes=[
                pltpu.VMEM((1, D), jnp.float32),                  # acc_mean
                pltpu.VMEM((1, D), jnp.float32),                  # acc_M2
            ],
        ),
        compiler_params=pltpu.CompilerParams(
            dimension_semantics=("arbitrary",),                   # sequential reduction
            vmem_limit_bytes=_VMEM_LIMIT_BYTES,
        ),
    )(count1, obs, mean2d, var2d)

    out = pl.pallas_call(
        _normalize_kernel,
        out_shape=jax.ShapeDtypeStruct((B, D), out_dtype),
        grid_spec=pltpu.PrefetchScalarGridSpec(
            num_scalar_prefetch=0,
            grid=(nt,),
            in_specs=[
                pl.BlockSpec((tb, D), lambda t: (t, 0)),          # obs tiles
                pl.BlockSpec((1, D), lambda t: (0, 0)),           # new_mean (resident)
                pl.BlockSpec((1, D), lambda t: (0, 0)),           # inv_std  (resident)
            ],
            out_specs=pl.BlockSpec((tb, D), lambda t: (t, 0)),
        ),
        compiler_params=pltpu.CompilerParams(
            dimension_semantics=("parallel",),                    # megacore-shardable (v7x)
            vmem_limit_bytes=_VMEM_LIMIT_BYTES,
        ),
    )(obs, new_mean2d, inv_std2d)

    return out, new_mean2d[0], new_var2d[0], new_count


def _reference(obs, mean, var, count):
    # Pure-JAX reference mirroring the PyTorch module.
    obs = obs.astype(jnp.float32)
    batch_mean = jnp.mean(obs, axis=0)
    batch_var = jnp.var(obs, axis=0)          # ddof=0 == correction=0
    batch_count = obs.shape[0]
    delta = batch_mean - mean
    tot_count = count + batch_count
    new_mean = mean + delta * batch_count / tot_count
    m2 = (var * count + batch_var * batch_count
          + jnp.square(delta) * count * batch_count / tot_count)
    new_var = m2 / tot_count
    out = (obs - new_mean) / jnp.sqrt(new_var + EPS)
    return out, new_mean, new_var, tot_count


if __name__ == "__main__":
    key = jax.random.PRNGKey(0)
    B, D = 8, 32  # small observation batch, feature dim

    obs = jax.random.normal(key, (B, D), dtype=jnp.float32) * 2.0 + 0.5

    # Deterministic buffer init, matching RunningMeanStd.__init__(shape=(D,))
    running_mean = jnp.zeros((D,), jnp.float32)
    running_var = jnp.ones((D,), jnp.float32)
    count = jnp.ones((), jnp.float32)

    # --- Fast single-visit path (small obs fits in VMEM) ---
    out, new_mean, new_var, new_count = running_mean_std_forward(
        obs, running_mean, running_var, count)
    jax.block_until_ready((out, new_mean, new_var, new_count))

    ref_out, ref_mean, ref_var, ref_count = _reference(obs, running_mean, running_var, count)
    assert jnp.allclose(out, ref_out, atol=1e-4, rtol=1e-4)
    assert jnp.allclose(new_mean, ref_mean, atol=1e-4, rtol=1e-4)
    assert jnp.allclose(new_var, ref_var, atol=1e-4, rtol=1e-4)
    assert jnp.allclose(new_count, ref_count)

    # --- Tiled path (stats pass + parallel normalize), ragged last tile ---
    B2 = 20
    obs2 = jax.random.normal(jax.random.PRNGKey(1), (B2, D), dtype=jnp.float32) * 1.5 - 0.25
    out2, nm2, nv2, nc2 = running_mean_std_forward(
        obs2, running_mean, running_var, count, force_tiled=True, tile_rows=8)
    jax.block_until_ready((out2, nm2, nv2, nc2))

    r_out2, r_mean2, r_var2, r_count2 = _reference(obs2, running_mean, running_var, count)
    assert jnp.allclose(out2, r_out2, atol=1e-4, rtol=1e-4)
    assert jnp.allclose(nm2, r_mean2, atol=1e-4, rtol=1e-4)
    assert jnp.allclose(nv2, r_var2, atol=1e-4, rtol=1e-4)
    assert jnp.allclose(nc2, r_count2)

    print("KERNEL_OK")
</pallas_src>

<mosaic_0001>
module attributes {stable_mosaic.version = 11 : i64} {
  func.func @_fused_kernel(%arg0: i32, %arg1: memref<1xf32, #tpu.memory_space<smem>>, %arg2: memref<8x32xf32, #tpu.memory_space<vmem>>, %arg3: memref<1x32xf32, #tpu.memory_space<vmem>>, %arg4: memref<1x32xf32, #tpu.memory_space<vmem>>, %arg5: memref<8x32xf32, #tpu.memory_space<vmem>>, %arg6: memref<1x32xf32, #tpu.memory_space<vmem>>, %arg7: memref<1x32xf32, #tpu.memory_space<vmem>>) attributes {dimension_semantics = [#tpu.dimension_semantics<arbitrary>], iteration_bounds = array<i64: 1>, scalar_prefetch = 0 : i64, scratch_operands = 0 : i64, tpu.core_type = #tpu.core_type<tc>, window_params = [{transform_indices = @transform_0, window_bounds = array<i64: 1>}, {pipeline_mode = #tpu.pipeline_mode<synchronous>, transform_indices = @transform_1, window_bounds = array<i64: 8, 32>}, {pipeline_mode = #tpu.pipeline_mode<synchronous>, transform_indices = @transform_2, window_bounds = array<i64: 1, 32>}, {pipeline_mode = #tpu.pipeline_mode<synchronous>, transform_indices = @transform_3, window_bounds = array<i64: 1, 32>}, {pipeline_mode = #tpu.pipeline_mode<synchronous>, transform_indices = @transform_4, window_bounds = array<i64: 8, 32>}, {pipeline_mode = #tpu.pipeline_mode<synchronous>, transform_indices = @transform_5, window_bounds = array<i64: 1, 32>}, {pipeline_mode = #tpu.pipeline_mode<synchronous>, transform_indices = @transform_6, window_bounds = array<i64: 1, 32>}]} {
    %c0 = arith.constant 0 : index
    %c0_0 = arith.constant 0 : index
    %0 = vector.load %arg2[%c0, %c0_0] : memref<8x32xf32, #tpu.memory_space<vmem>>, vector<8x32xf32>
    %c0_1 = arith.constant 0 : index
    %1 = memref.load %arg1[%c0_1] : memref<1xf32, #tpu.memory_space<smem>>
    %cst = arith.constant dense<0.000000e+00> : vector<32xf32>
    %2 = vector.multi_reduction <add>, %0, %cst [0] : vector<8x32xf32> to vector<32xf32>
    %3 = vector.shape_cast %2 : vector<32xf32> to vector<1x32xf32>
    %4 = arith.mulf %0, %0 : vector<8x32xf32>
    %cst_2 = arith.constant dense<0.000000e+00> : vector<32xf32>
    %5 = vector.multi_reduction <add>, %4, %cst_2 [0] : vector<8x32xf32> to vector<32xf32>
    %6 = vector.shape_cast %5 : vector<32xf32> to vector<1x32xf32>
    %cst_3 = arith.constant 1.250000e-01 : f32
    %7 = vector.broadcast %cst_3 : f32 to vector<1x32xf32>
    %8 = arith.mulf %3, %7 : vector<1x32xf32>
    %cst_4 = arith.constant 1.250000e-01 : f32
    %9 = vector.broadcast %cst_4 : f32 to vector<1x32xf32>
    %10 = arith.mulf %6, %9 : vector<1x32xf32>
    %11 = arith.mulf %8, %8 : vector<1x32xf32>
    %12 = arith.subf %10, %11 : vector<1x32xf32>
    %cst_5 = arith.constant 8.000000e+00 : f32
    %13 = arith.addf %1, %cst_5 : f32
    %cst_6 = arith.constant 8.000000e+00 : f32
    %14 = arith.divf %cst_6, %13 : f32
    %c0_7 = arith.constant 0 : index
    %c0_8 = arith.constant 0 : index
    %15 = vector.load %arg3[%c0_7, %c0_8] : memref<1x32xf32, #tpu.memory_space<vmem>>, vector<1x32xf32>
    %16 = arith.subf %8, %15 : vector<1x32xf32>
    %c0_9 = arith.constant 0 : index
    %c0_10 = arith.constant 0 : index
    %17 = vector.load %arg3[%c0_9, %c0_10] : memref<1x32xf32, #tpu.memory_space<vmem>>, vector<1x32xf32>
    %18 = vector.broadcast %14 : f32 to vector<1x32xf32>
    %19 = arith.mulf %16, %18 : vector<1x32xf32>
    %20 = arith.addf %17, %19 : vector<1x32xf32>
    %c0_11 = arith.constant 0 : index
    %c0_12 = arith.constant 0 : index
    %21 = vector.load %arg4[%c0_11, %c0_12] : memref<1x32xf32, #tpu.memory_space<vmem>>, vector<1x32xf32>
    %22 = vector.broadcast %1 : f32 to vector<1x32xf32>
    %23 = arith.mulf %21, %22 : vector<1x32xf32>
    %cst_13 = arith.constant 8.000000e+00 : f32
    %24 = vector.broadcast %cst_13 : f32 to vector<1x32xf32>
    %25 = arith.mulf %12, %24 : vector<1x32xf32>
    %26 = arith.addf %23, %25 : vector<1x32xf32>
    %27 = arith.mulf %16, %16 : vector<1x32xf32>
    %28 = arith.mulf %1, %14 : f32
    %29 = vector.broadcast %28 : f32 to vector<1x32xf32>
    %30 = arith.mulf %27, %29 : vector<1x32xf32>
    %31 = arith.addf %26, %30 : vector<1x32xf32>
    %32 = vector.broadcast %13 : f32 to vector<1x32xf32>
    %33 = arith.divf %31, %32 : vector<1x32xf32>
    %cst_14 = arith.constant 9.99999993E-9 : f32
    %34 = vector.broadcast %cst_14 : f32 to vector<1x32xf32>
    %35 = arith.addf %33, %34 : vector<1x32xf32>
    %36 = math.rsqrt %35 : vector<1x32xf32>
    %c0_15 = arith.constant 0 : index
    %c0_16 = arith.constant 0 : index
    %37 = vector.load %arg6[%c0_15, %c0_16] : memref<1x32xf32, #tpu.memory_space<vmem>>, vector<1x32xf32>
    tpu.vector_store %arg6[%c0_15, %c0_16], %20 {strides = array<i32>} : memref<1x32xf32, #tpu.memory_space<vmem>>, vector<1x32xf32>,
    %c0_17 = arith.constant 0 : index
    %c0_18 = arith.constant 0 : index
    %38 = vector.load %arg7[%c0_17, %c0_18] : memref<1x32xf32, #tpu.memory_space<vmem>>, vector<1x32xf32>
    tpu.vector_store %arg7[%c0_17, %c0_18], %33 {strides = array<i32>} : memref<1x32xf32, #tpu.memory_space<vmem>>, vector<1x32xf32>,
    %39 = vector.broadcast %20 : vector<1x32xf32> to vector<8x32xf32>
    %40 = arith.subf %0, %39 : vector<8x32xf32>
    %41 = vector.broadcast %36 : vector<1x32xf32> to vector<8x32xf32>
    %42 = arith.mulf %40, %41 : vector<8x32xf32>
    %c0_19 = arith.constant 0 : index
    %c0_20 = arith.constant 0 : index
    %43 = vector.load %arg5[%c0_19, %c0_20] : memref<8x32xf32, #tpu.memory_space<vmem>>, vector<8x32xf32>
    tpu.vector_store %arg5[%c0_19, %c0_20], %42 {strides = array<i32>} : memref<8x32xf32, #tpu.memory_space<vmem>>, vector<8x32xf32>,
    return
  }
  func.func @transform_0(%arg0: i32) -> i32 {
    %c0_i32 = arith.constant 0 : i32
    %c0_i32_0 = arith.constant 0 : i32
    return %c0_i32 : i32
  }
  func.func @transform_1(%arg0: i32) -> (i32, i32) {
    %c0_i32 = arith.constant 0 : i32
    %c0_i32_0 = arith.constant 0 : i32
    %c0_i32_1 = arith.constant 0 : i32
    return %c0_i32, %c0_i32_0 : i32, i32
  }
  func.func @transform_2(%arg0: i32) -> (i32, i32) {
    %c0_i32 = arith.constant 0 : i32
    %c0_i32_0 = arith.constant 0 : i32
    %c0_i32_1 = arith.constant 0 : i32
    return %c0_i32, %c0_i32_0 : i32, i32
  }
  func.func @transform_3(%arg0: i32) -> (i32, i32) {
    %c0_i32 = arith.constant 0 : i32
    %c0_i32_0 = arith.constant 0 : i32
    %c0_i32_1 = arith.constant 0 : i32
    return %c0_i32, %c0_i32_0 : i32, i32
  }
  func.func @transform_4(%arg0: i32) -> (i32, i32) {
    %c0_i32 = arith.constant 0 : i32
    %c0_i32_0 = arith.constant 0 : i32
    %c0_i32_1 = arith.constant 0 : i32
    return %c0_i32, %c0_i32_0 : i32, i32
  }
  func.func @transform_5(%arg0: i32) -> (i32, i32) {
    %c0_i32 = arith.constant 0 : i32
    %c0_i32_0 = arith.constant 0 : i32
    %c0_i32_1 = arith.constant 0 : i32
    return %c0_i32, %c0_i32_0 : i32, i32
  }
  func.func @transform_6(%arg0: i32) -> (i32, i32) {
    %c0_i32 = arith.constant 0 : i32
    %c0_i32_0 = arith.constant 0 : i32
    %c0_i32_1 = arith.constant 0 : i32
    return %c0_i32, %c0_i32_0 : i32, i32
  }
}

</mosaic_0001>

<llo_original>
// kernel: tpu_custom_call.1
$region0: #{tpu_custom_call.1}
  #allocation0 [shape = 'u32[]', space=smem, size = 0x4, offset = 0x4, fixed_abs, tag = 'smem constant byte address 0x4 - core index']
  #allocation1 [shape = 'u32[144,128]{1,0:T(1,128)}', space=vmem, size = 0x12000, scoped, tag = 'internal scratch']
  #allocation2 [shape = 'f32[1]{0:T(128)S(6)}', space=smem, size = 0x200, scoped, tag = 'scoped memory for tpu_custom_call.1']
  %s0 = inlined_call_operand.<no memory space> [shape: f32[1], index: 0, kind: input, shape index: {}]
  %s1 = inlined_call_operand.hbm [shape: f32[8,32], index: 1, kind: input, shape index: {}]
  %s2 = inlined_call_operand.vmem [shape: f32[1,32], index: 2, kind: input, shape index: {}]
  %s3 = inlined_call_operand.vmem [shape: f32[1,32], index: 3, kind: input, shape index: {}]
  %s4 = inlined_call_operand.hbm [shape: f32[8,32], index: 4, kind: output, shape index: {0}]
  %s5 = inlined_call_operand.hbm [shape: f32[1,32], index: 5, kind: output, shape index: {1}]
  %s6 = inlined_call_operand.hbm [shape: f32[1,32], index: 6, kind: output, shape index: {2}]
  %7 = xla_tuple %s4, %s5, %s6
  %s8 = sld [smem:[#allocation0]]
  $region46: #{tpu_custom_call.1} parent=0
    _
  %s10 = ssub.s32 1, %s8
  %s11 = scalar_select 0, %s10, %s8
  %12 = sst [smem:[#allocation2]] %s0
  $region1: #{tpu_custom_call.1} parent=0
    #allocation3 [shape = 'u8[4096]{0}', space=vmem, size = 0x1000, scoped, tag = 'input window, operand 1, single buffered']
    #allocation4 [shape = 's32[1]{0}', space=sflag, size = 0x4, scoped, tag = 'scoped memory for tpu_custom_call.1']
    #allocation5 [shape = 's32[1]{0}', space=sflag, size = 0x4, scoped, tag = 'scoped memory for tpu_custom_call.1']
    #allocation6 [shape = 'u8[4096]{0}', space=vmem, size = 0x1000, scoped, tag = 'output window, operand 0, single buffered']
    #allocation7 [shape = 'u8[512]{0}', space=vmem, size = 0x400, scoped, tag = 'output window, operand 1, single buffered']
    #allocation8 [shape = 's32[1]{0}', space=sflag, size = 0x4, scoped, tag = 'scoped memory for tpu_custom_call.1']
    #allocation9 [shape = 'u8[512]{0}', space=vmem, size = 0x400, scoped, tag = 'output window, operand 2, single buffered']
    %13 = vsyncpa [#allocation4], 0
    %14 = vsyncpa [#allocation5], 0
    %15 = vsyncpa [#allocation8], 0
    // Predicated region
    $region2: #{tpu_custom_call.1} parent=1 // pred_check
      _
    $region3: #{tpu_custom_call.1} parent=1 // pred_check_branch
      %17 = sbr.rel (0) target = $region5
    $region4: #{tpu_custom_call.1} parent=1 // pred_region
      _
    $region5: #{tpu_custom_call.1} parent=1 // pred_fallthru
      _
    // Predicated region
    $region6: #{tpu_custom_call.1} parent=1 // pred_check
      _
    $region7: #{tpu_custom_call.1} parent=1 // pred_check_branch
      %19 = sbr.rel (0) target = $region9
    $region8: #{tpu_custom_call.1} parent=1 // pred_region
      %s21 = ssub.s32 128, 128
      %22 = vsyncadd [#allocation4], %s21
      %s24 = sshll.u32 [#allocation3], 4
      %s25 = int_to_ptr.vmem [resolvable:$true] %s24
      %27 = dma.hbm_to_vmem [thread:$0]  %s1, 128, %s25, [#allocation4]
    $region9: #{tpu_custom_call.1} parent=1 // pred_fallthru
      _
    // Predicated region
    $region10: #{tpu_custom_call.1} parent=1 // pred_check
      _
    $region11: #{tpu_custom_call.1} parent=1 // pred_check_branch
      %29 = sbr.rel (0) target = $region13
    $region12: #{tpu_custom_call.1} parent=1 // pred_region
      _
    $region13: #{tpu_custom_call.1} parent=1 // pred_fallthru
      _
    // Predicated region
    $region14: #{tpu_custom_call.1} parent=1 // pred_check
      _
    $region15: #{tpu_custom_call.1} parent=1 // pred_check_branch
      %31 = sbr.rel (0) target = $region17
    $region16: #{tpu_custom_call.1} parent=1 // pred_region
      _
    $region17: #{tpu_custom_call.1} parent=1 // pred_fallthru
      _
    // Predicated region
    $region18: #{tpu_custom_call.1} parent=1 // pred_check
      _
    $region19: #{tpu_custom_call.1} parent=1 // pred_check_branch
      %33 = sbr.rel (0) target = $region21
    $region20: #{tpu_custom_call.1} parent=1 // pred_region
      %34 = dma.done [#allocation4], 128
    $region21: #{tpu_custom_call.1} parent=1 // pred_fallthru
      _
    %v35 = vld [vmem:[#allocation3] sm:$0xff]
    %s36 = sld [smem:[#allocation2]]
    %vm37 = vcmask 261120
    %v38 = vsel %vm37, %v35, 0.0
    %v39 = vrot.slane %v38, 4
    %v40 = vadd.f32 %v38, %v39
    %v41 = vrot.slane %v40, 2
    %v42 = vadd.f32 %v40, %v41
    %v43 = vrot.slane %v42, 1
    %v44 = vadd.f32 %v42, %v43
    %v45 = vmul.f32 %v35, %v35
    %v46 = vsel %vm37, %v45, 0.0
    %v47 = vrot.slane %v46, 4
    %v48 = vadd.f32 %v46, %v47
    %v49 = vrot.slane %v48, 2
    %v50 = vadd.f32 %v48, %v49
    %v51 = vrot.slane %v50, 1
    %v52 = vadd.f32 %v50, %v51
    %v53 = vmul.f32 %v44, 0.125
    %v54 = vmul.f32 %v52, 0.125
    %v55 = vmul.f32 %v53, %v53
    %v56 = vsub.f32 %v54, %v55
    %s57 = sadd.f32 %s36, 8.0
    %v58 = vstv %s57
    %v59 = vrcp.pop %v58
    %s60 = vtos %v59
    %s61 = smul.f32 8.0, %s60
    %v62 = vld [vmem:[%s2] sm:$0x1]
    %v63 = vsub.f32 %v53, %v62
    %v64 = vstv %s61
    %v65 = vmul.f32 %v63, %v64
    %v66 = vadd.f32 %v62, %v65
    %v67 = vld [vmem:[%s3] sm:$0x1]
    %v68 = vstv %s36
    %v69 = vmul.f32 %v67, %v68
    %v70 = vmul.f32 %v56, 8.0
    %v71 = vadd.f32 %v69, %v70
    %v72 = vmul.f32 %v63, %v63
    %s73 = smul.f32 %s36, %s61
    %v74 = vstv %s73
    %v75 = vmul.f32 %v72, %v74
    %v76 = vadd.f32 %v71, %v75
    %v77 = vstv %s57
    %v78 = vrcp.pop %v77
    %v79 = vmul.f32 %v76, %v78
    %v80 = vadd.f32 %v79, 1e-08
    %v81 = vrsqrt.pop %v80
    %vm82 = vcmask 253952
    %83 = vst.msk [vmem:[#allocation7] sm:$0x1] %vm82, %v66
    %84 = vst.msk [vmem:[#allocation9] sm:$0x1] %vm82, %v79
    %v86 = vlaneseq
    %v87 = vshrl.u32 %v86, 7
    %v88 = vsub.s32 0, %v87
    %v89 = vrot.slane %v66, %v88
    %v91 = vsub.f32 %v35, %v89
    %v93 = vlaneseq
    %v94 = vshrl.u32 %v93, 7
    %v95 = vsub.s32 0, %v94
    %v96 = vrot.slane %v81, %v95
    %v98 = vmul.f32 %v91, %v96
    %99 = vst.msk [vmem:[#allocation6] sm:$0xff] %vm37, %v98
    // Predicated region
    $region22: #{tpu_custom_call.1} parent=1 // pred_check
      _
    $region23: #{tpu_custom_call.1} parent=1 // pred_check_branch
      %101 = sbr.rel (0) target = $region25
    $region24: #{tpu_custom_call.1} parent=1 // pred_region
      %s103 = ssub.s32 128, 128
      %104 = vsyncadd [#allocation5], %s103
      %s106 = sshll.u32 [#allocation6], 4
      %s107 = int_to_ptr.vmem [resolvable:$true] %s106
      %109 = dma.vmem_to_hbm [thread:$0]  %s107, 128, %s4, [#allocation5]
    $region25: #{tpu_custom_call.1} parent=1 // pred_fallthru
      _
    // Predicated region
    $region26: #{tpu_custom_call.1} parent=1 // pred_check
      _
    $region27: #{tpu_custom_call.1} parent=1 // pred_check_branch
      %111 = sbr.rel (0) target = $region29
    $region28: #{tpu_custom_call.1} parent=1 // pred_region
      %s113 = ssub.s32 16, 16
      %114 = vsyncadd [#allocation8], %s113
      %s116 = sshll.u32 [#allocation7], 4
      %s117 = int_to_ptr.vmem [resolvable:$true] %s116
      %119 = dma.vmem_to_hbm [thread:$0]  %s117, 16, %s5, [#allocation8]
    $region29: #{tpu_custom_call.1} parent=1 // pred_fallthru
      _
    // Predicated region
    $region30: #{tpu_custom_call.1} parent=1 // pred_check
      _
    $region31: #{tpu_custom_call.1} parent=1 // pred_check_branch
      %121 = sbr.rel (0) target = $region33
    $region32: #{tpu_custom_call.1} parent=1 // pred_region
      %s123 = ssub.s32 16, 16
      %124 = vsyncadd [#allocation8], %s123
      %s126 = sshll.u32 [#allocation9], 4
      %s127 = int_to_ptr.vmem [resolvable:$true] %s126
      %129 = dma.vmem_to_hbm [thread:$0]  %s127, 16, %s6, [#allocation8]
    $region33: #{tpu_custom_call.1} parent=1 // pred_fallthru
      _
    // Predicated region
    $region34: #{tpu_custom_call.1} parent=1 // pred_check
      _
    $region35: #{tpu_custom_call.1} parent=1 // pred_check_branch
      %131 = sbr.rel (0) target = $region37
    $region36: #{tpu_custom_call.1} parent=1 // pred_region
      %132 = dma.done [#allocation5], 128
    $region37: #{tpu_custom_call.1} parent=1 // pred_fallthru
      _
    // Predicated region
    $region38: #{tpu_custom_call.1} parent=1 // pred_check
      _
    $region39: #{tpu_custom_call.1} parent=1 // pred_check_branch
      %134 = sbr.rel (0) target = $region41
    $region40: #{tpu_custom_call.1} parent=1 // pred_region
      %135 = dma.done [#allocation8], 16
    $region41: #{tpu_custom_call.1} parent=1 // pred_fallthru
      _
    // Predicated region
    $region42: #{tpu_custom_call.1} parent=1 // pred_check
      _
    $region43: #{tpu_custom_call.1} parent=1 // pred_check_branch
      %137 = sbr.rel (0) target = $region45
    $region44: #{tpu_custom_call.1} parent=1 // pred_region
      %138 = dma.done [#allocation8], 16
    $region45: #{tpu_custom_call.1} parent=1 // pred_fallthru
      _
    %139 = vsyncpa [#allocation4], 1
    %140 = vsyncpa [#allocation5], 1
    %141 = vsyncpa [#allocation8], 1

</llo_original>
